<compile_context>
chip_gen: v6e
topology: v6e:2x2x1
jax: 0.10.0
libtpu: 0.0.40
codegen_flags: <defaults>
</compile_context>

<pallas_src>
import functools

import jax
import jax.numpy as jnp
from jax import lax
from jax.experimental import pallas as pl
from jax.experimental.pallas import tpu as pltpu

IN_FEATURES = 20
HIDDEN1 = 128
HIDDEN2 = 64


def _mlp_kernel(x_ref, w1_ref, b1_ref, w2_ref, b2_ref, w3_ref, b3_ref, o_ref):
    # x_ref: [TILE_B, 20] in its natural row-major layout (no host transpose).
    xb = x_ref[...].astype(jnp.bfloat16)                           # [tile, 20]

    # Linear(20 -> 128) + ReLU, transposed (batch on lanes):
    #   h1T = relu(W1 @ xT + b1), done as "A @ B.T" so the layout swap lives
    #   inside the kernel instead of a standalone HBM transpose pass.
    h1 = lax.dot_general(w1_ref[...], xb, (((1,), (1,)), ((), ())),
                         preferred_element_type=jnp.float32)       # [128, tile]
    # Fused bias + ReLU + bf16 cast: h1 materialized once, in bf16.
    h1 = jnp.maximum(h1 + b1_ref[...], 0.0).astype(jnp.bfloat16)

    # Linear(128 -> 64) + ReLU : h2T = relu(W2 @ h1T + b2)
    h2 = jnp.dot(w2_ref[...], h1, preferred_element_type=jnp.float32)   # [64, tile]
    h2 = jnp.maximum(h2 + b2_ref[...], 0.0)

    # Linear(64 -> 1) + Sigmoid : VPU multiply + sublane reduce (no N=1 matmul),
    # consumed immediately; lane-dense [1, tile] output row.
    h3 = jnp.sum(h2 * w3_ref[...], axis=0, keepdims=True)               # [1, tile]
    o_ref[...] = jax.nn.sigmoid(h3 + b3_ref[0, 0]).astype(o_ref.dtype)


def _round_up(n, m):
    return ((n + m - 1) // m) * m


@functools.partial(jax.jit, static_argnames=("tile_b",))
def audio_urgency_forward(x, params, *, tile_b=8192):
    """x: [B, 20] float32 (or bfloat16) -> [B, 1] float32, same as AudioUrgencyModel."""
    w1, b1, w2, b2, w3, b3 = params
    B = x.shape[0]

    # Lane tile: cap rounded DOWN to a multiple of 128.  Small batches use a
    # single full-extent block (always legal under the (8,128) rule); batches
    # that fit the cap but are big enough get >=2 grid steps so the "parallel"
    # axis can split across the two v7x TensorCores.  Ragged trailing blocks
    # are safe here: every op is lane-local and OOB output lanes are masked.
    tile_cap = max(128, (int(tile_b) // 128) * 128)
    if B <= 256:
        tile = B
    elif B <= tile_cap:
        tile = _round_up(pl.cdiv(B, 2), 128)
    else:
        tile = tile_cap
    grid = pl.cdiv(B, tile)

    # ~1.3 KiB of VMEM per batch lane (double-buffered x tile + f32/bf16 hidden
    # activations) -> explicit, bounded scoped-VMEM budget for all generations.
    vmem_limit = int(min(max(32 * 1024 * 1024, 2048 * tile), 110 * 1024 * 1024))

    const = lambda shape: pl.BlockSpec(shape, lambda i: (0, 0))    # VMEM-resident

    out = pl.pallas_call(
        _mlp_kernel,
        out_shape=jax.ShapeDtypeStruct((1, B), jnp.float32),
        grid=(grid,),
        in_specs=[
            pl.BlockSpec((tile, IN_FEATURES), lambda i: (i, 0)),   # x tile (natural layout)
            const((HIDDEN1, IN_FEATURES)),                         # W1 (bf16)
            const((HIDDEN1, 1)),                                   # b1
            const((HIDDEN2, HIDDEN1)),                             # W2 (bf16)
            const((HIDDEN2, 1)),                                   # b2
            const((HIDDEN2, 1)),                                   # w3 column
            pl.BlockSpec(memory_space=pltpu.MemorySpace.SMEM),     # b3 scalar
        ],
        out_specs=pl.BlockSpec((1, tile), lambda i: (0, i)),       # lane-dense
        compiler_params=pltpu.CompilerParams(
            dimension_semantics=("parallel",),                     # v7x megacore
            vmem_limit_bytes=vmem_limit),
    )(x, w1, b1, w2, b2, w3, b3)

    return out.reshape(B, 1)                                       # (1,B)->(B,1): free


def init_params(key):
    """PyTorch nn.Linear-style init: U(-1/sqrt(fan_in), +1/sqrt(fan_in)).

    W1/W2 stored bf16 in [out, in] orientation; biases and the final weight
    column kept f32 (VPU/EUP path)."""
    def linear(key, fan_in, fan_out):
        kw, kb = jax.random.split(key)
        bound = 1.0 / jnp.sqrt(jnp.float32(fan_in))
        w = jax.random.uniform(kw, (fan_out, fan_in), jnp.float32, -bound, bound)
        b = jax.random.uniform(kb, (fan_out, 1), jnp.float32, -bound, bound)
        return w, b

    k1, k2, k3 = jax.random.split(key, 3)
    w1, b1 = linear(k1, IN_FEATURES, HIDDEN1)
    w2, b2 = linear(k2, HIDDEN1, HIDDEN2)
    w3, b3 = linear(k3, HIDDEN2, 1)
    return (w1.astype(jnp.bfloat16), b1,
            w2.astype(jnp.bfloat16), b2,
            w3.T,                       # stored as [64, 1] column, f32
            b3)                         # [1, 1] scalar, f32 (SMEM)


def _reference(x, params):
    """Plain-JAX reference with the same mixed precision as the kernel."""
    w1, b1, w2, b2, w3, b3 = params
    xb = x.astype(jnp.bfloat16)
    h1 = jnp.maximum(
        jnp.dot(xb, w1.T, preferred_element_type=jnp.float32) + b1[:, 0], 0.0)
    h2 = jnp.maximum(
        jnp.dot(h1.astype(jnp.bfloat16), w2.T,
                preferred_element_type=jnp.float32) + b2[:, 0], 0.0)
    return jax.nn.sigmoid(h2 @ w3 + b3[0, 0])


if __name__ == "__main__":
    key = jax.random.PRNGKey(0)
    k_params, k_x, k_x2 = jax.random.split(key, 3)

    params = init_params(k_params)

    # Small shape consistent with the module: batch=8, 20 audio features.
    x = jax.random.normal(k_x, (8, IN_FEATURES), jnp.float32)
    out = jax.block_until_ready(audio_urgency_forward(x, params))
    assert out.shape == (8, 1)
    ref = _reference(x, params)
    assert jnp.allclose(out, ref, atol=1e-3, rtol=1e-3), (
        float(jnp.max(jnp.abs(out - ref))))

    # Larger batch with a small tile: exercises a multi-step grid + ragged tail.
    x2 = jax.random.normal(k_x2, (1000, IN_FEATURES), jnp.float32)
    out2 = jax.block_until_ready(audio_urgency_forward(x2, params, tile_b=256))
    assert out2.shape == (1000, 1)
    ref2 = _reference(x2, params)
    assert jnp.allclose(out2, ref2, atol=1e-3, rtol=1e-3), (
        float(jnp.max(jnp.abs(out2 - ref2))))

    # Default (large-tile, 2-step) path on the same batch.
    out3 = jax.block_until_ready(audio_urgency_forward(x2, params))
    assert out3.shape == (1000, 1)
    assert jnp.allclose(out3, ref2, atol=1e-3, rtol=1e-3), (
        float(jnp.max(jnp.abs(out3 - ref2))))

    print("KERNEL_OK")
</pallas_src>

<mosaic_0001>
module attributes {stable_mosaic.version = 11 : i64} {
  func.func @_mlp_kernel(%arg0: i32, %arg1: memref<8x20xf32, #tpu.memory_space<vmem>>, %arg2: memref<128x20xbf16, #tpu.memory_space<vmem>>, %arg3: memref<128x1xf32, #tpu.memory_space<vmem>>, %arg4: memref<64x128xbf16, #tpu.memory_space<vmem>>, %arg5: memref<64x1xf32, #tpu.memory_space<vmem>>, %arg6: memref<64x1xf32, #tpu.memory_space<vmem>>, %arg7: memref<1x1xf32, #tpu.memory_space<smem>>, %arg8: memref<1x8xf32, #tpu.memory_space<vmem>>) attributes {dimension_semantics = [#tpu.dimension_semantics<parallel>], iteration_bounds = array<i64: 1>, scalar_prefetch = 0 : i64, scratch_operands = 0 : i64, tpu.core_type = #tpu.core_type<tc>, window_params = [{transform_indices = @transform_0, window_bounds = array<i64: 8, 20>}, {pipeline_mode = #tpu.pipeline_mode<synchronous>, transform_indices = @transform_1, window_bounds = array<i64: 128, 20>}, {pipeline_mode = #tpu.pipeline_mode<synchronous>, transform_indices = @transform_2, window_bounds = array<i64: 128, 1>}, {pipeline_mode = #tpu.pipeline_mode<synchronous>, transform_indices = @transform_3, window_bounds = array<i64: 64, 128>}, {pipeline_mode = #tpu.pipeline_mode<synchronous>, transform_indices = @transform_4, window_bounds = array<i64: 64, 1>}, {pipeline_mode = #tpu.pipeline_mode<synchronous>, transform_indices = @transform_5, window_bounds = array<i64: 64, 1>}, {transform_indices = @transform_6, window_bounds = array<i64: 1, 1>}, {transform_indices = @transform_7, window_bounds = array<i64: 1, 8>}]} {
    %c0 = arith.constant 0 : index
    %c0_0 = arith.constant 0 : index
    %0 = vector.load %arg1[%c0, %c0_0] : memref<8x20xf32, #tpu.memory_space<vmem>>, vector<8x20xf32>
    %1 = arith.truncf %0 : vector<8x20xf32> to vector<8x20xbf16>
    %c0_1 = arith.constant 0 : index
    %c0_2 = arith.constant 0 : index
    %2 = vector.load %arg2[%c0_1, %c0_2] : memref<128x20xbf16, #tpu.memory_space<vmem>>, vector<128x20xbf16>
    %cst = arith.constant dense<0.000000e+00> : vector<128x8xf32>
    %3 = tpu.matmul %2, %1, %cst {dimension_numbers = #tpu.dot_dimension_numbers<[1], [1], [0], [0], [0, 0, 1, 0], [], []>} : vector<128x20xbf16>, vector<8x20xbf16>, vector<128x8xf32> -> vector<128x8xf32>
    %c0_3 = arith.constant 0 : index
    %c0_4 = arith.constant 0 : index
    %4 = vector.load %arg3[%c0_3, %c0_4] : memref<128x1xf32, #tpu.memory_space<vmem>>, vector<128x1xf32>
    %5 = vector.broadcast %4 : vector<128x1xf32> to vector<128x8xf32>
    %6 = arith.addf %3, %5 : vector<128x8xf32>
    %cst_5 = arith.constant 0.000000e+00 : f32
    %7 = vector.broadcast %cst_5 : f32 to vector<128x8xf32>
    %8 = arith.maximumf %6, %7 : vector<128x8xf32>
    %9 = arith.truncf %8 : vector<128x8xf32> to vector<128x8xbf16>
    %c0_6 = arith.constant 0 : index
    %c0_7 = arith.constant 0 : index
    %10 = vector.load %arg4[%c0_6, %c0_7] : memref<64x128xbf16, #tpu.memory_space<vmem>>, vector<64x128xbf16>
    %cst_8 = arith.constant dense<0.000000e+00> : vector<64x8xf32>
    %11 = tpu.matmul %10, %9, %cst_8 {dimension_numbers = #tpu.dot_dimension_numbers<[1], [0], [0], [1], [0, 0, 1, 1], [], []>} : vector<64x128xbf16>, vector<128x8xbf16>, vector<64x8xf32> -> vector<64x8xf32>
    %c0_9 = arith.constant 0 : index
    %c0_10 = arith.constant 0 : index
    %12 = vector.load %arg5[%c0_9, %c0_10] : memref<64x1xf32, #tpu.memory_space<vmem>>, vector<64x1xf32>
    %13 = vector.broadcast %12 : vector<64x1xf32> to vector<64x8xf32>
    %14 = arith.addf %11, %13 : vector<64x8xf32>
    %cst_11 = arith.constant 0.000000e+00 : f32
    %15 = vector.broadcast %cst_11 : f32 to vector<64x8xf32>
    %16 = arith.maximumf %14, %15 : vector<64x8xf32>
    %c0_12 = arith.constant 0 : index
    %c0_13 = arith.constant 0 : index
    %17 = vector.load %arg6[%c0_12, %c0_13] : memref<64x1xf32, #tpu.memory_space<vmem>>, vector<64x1xf32>
    %18 = vector.broadcast %17 : vector<64x1xf32> to vector<64x8xf32>
    %19 = arith.mulf %16, %18 : vector<64x8xf32>
    %cst_14 = arith.constant dense<0.000000e+00> : vector<8xf32>
    %20 = vector.multi_reduction <add>, %19, %cst_14 [0] : vector<64x8xf32> to vector<8xf32>
    %21 = vector.shape_cast %20 : vector<8xf32> to vector<1x8xf32>
    %c0_15 = arith.constant 0 : index
    %c0_16 = arith.constant 0 : index
    %22 = memref.load %arg7[%c0_15, %c0_16] : memref<1x1xf32, #tpu.memory_space<smem>>
    %23 = vector.broadcast %22 : f32 to vector<1x8xf32>
    %24 = arith.addf %21, %23 : vector<1x8xf32>
    %25 = arith.negf %24 : vector<1x8xf32>
    %26 = math.exp %25 : vector<1x8xf32>
    %cst_17 = arith.constant 1.000000e+00 : f32
    %27 = vector.broadcast %cst_17 : f32 to vector<1x8xf32>
    %28 = arith.addf %27, %26 : vector<1x8xf32>
    %29 = arith.divf %27, %28 : vector<1x8xf32>
    %c0_18 = arith.constant 0 : index
    %c0_19 = arith.constant 0 : index
    %30 = vector.load %arg8[%c0_18, %c0_19] : memref<1x8xf32, #tpu.memory_space<vmem>>, vector<1x8xf32>
    tpu.vector_store %arg8[%c0_18, %c0_19], %29 {strides = array<i32>} : memref<1x8xf32, #tpu.memory_space<vmem>>, vector<1x8xf32>,
    return
  }
  func.func @transform_0(%arg0: i32) -> (i32, i32) {
    %c0_i32 = arith.constant 0 : i32
    %c0_i32_0 = arith.constant 0 : i32
    return %arg0, %c0_i32 : i32, i32
  }
  func.func @transform_1(%arg0: i32) -> (i32, i32) {
    %c0_i32 = arith.constant 0 : i32
    %c0_i32_0 = arith.constant 0 : i32
    %c0_i32_1 = arith.constant 0 : i32
    return %c0_i32, %c0_i32_0 : i32, i32
  }
  func.func @transform_2(%arg0: i32) -> (i32, i32) {
    %c0_i32 = arith.constant 0 : i32
    %c0_i32_0 = arith.constant 0 : i32
    %c0_i32_1 = arith.constant 0 : i32
    return %c0_i32, %c0_i32_0 : i32, i32
  }
  func.func @transform_3(%arg0: i32) -> (i32, i32) {
    %c0_i32 = arith.constant 0 : i32
    %c0_i32_0 = arith.constant 0 : i32
    %c0_i32_1 = arith.constant 0 : i32
    return %c0_i32, %c0_i32_0 : i32, i32
  }
  func.func @transform_4(%arg0: i32) -> (i32, i32) {
    %c0_i32 = arith.constant 0 : i32
    %c0_i32_0 = arith.constant 0 : i32
    %c0_i32_1 = arith.constant 0 : i32
    return %c0_i32, %c0_i32_0 : i32, i32
  }
  func.func @transform_5(%arg0: i32) -> (i32, i32) {
    %c0_i32 = arith.constant 0 : i32
    %c0_i32_0 = arith.constant 0 : i32
    %c0_i32_1 = arith.constant 0 : i32
    return %c0_i32, %c0_i32_0 : i32, i32
  }
  func.func @transform_6(%arg0: i32) -> (i32, i32) {
    %c0_i32 = arith.constant 0 : i32
    %c0_i32_0 = arith.constant 0 : i32
    %c0_i32_1 = arith.constant 0 : i32
    return %c0_i32, %c0_i32_0 : i32, i32
  }
  func.func @transform_7(%arg0: i32) -> (i32, i32) {
    %c0_i32 = arith.constant 0 : i32
    %c0_i32_0 = arith.constant 0 : i32
    return %c0_i32, %arg0 : i32, i32
  }
}

</mosaic_0001>

<llo_original>
// kernel: audio_urgency_forward.1
$region0: #{audio_urgency_forward.1}
  #allocation0 [shape = 'u32[]', space=smem, size = 0x4, offset = 0x4, fixed_abs, tag = 'smem constant byte address 0x4 - core index']
  #allocation1 [shape = 'u32[144,128]{1,0:T(1,128)}', space=vmem, size = 0x12000, scoped, tag = 'internal scratch']
  #allocation2 [shape = 'f32[1,1]{1,0:T(1,128)S(6)}', space=smem, size = 0x200, scoped, tag = 'scoped memory for audio_urgency_forward.1']
  %s0 = inlined_call_operand.vmem [shape: f32[8,20], index: 0, kind: input, shape index: {}]
  %s1 = inlined_call_operand.vmem [shape: bf16[128,20], index: 1, kind: input, shape index: {}]
  %s2 = inlined_call_operand.vmem [shape: f32[128,1], index: 2, kind: input, shape index: {}]
  %s3 = inlined_call_operand.vmem [shape: bf16[64,128], index: 3, kind: input, shape index: {}]
  %s4 = inlined_call_operand.vmem [shape: f32[64,1], index: 4, kind: input, shape index: {}]
  %s5 = inlined_call_operand.vmem [shape: f32[64,1], index: 5, kind: input, shape index: {}]
  %s6 = inlined_call_operand.<no memory space> [shape: f32[1,1], index: 6, kind: input, shape index: {}]
  %s7 = inlined_call_operand.hbm [shape: f32[1,8], index: 7, kind: output, shape index: {}]
  %s8 = sld [smem:[#allocation0]]
  $region38: #{audio_urgency_forward.1} parent=0
    _
  %s10 = ssub.s32 1, %s8
  %s11 = scalar_select 0, %s10, %s8
  %12 = sst [smem:[#allocation2]] %s6
  $region1: #{audio_urgency_forward.1} parent=0
    #allocation3 [shape = 'u8[512]{0}', space=vmem, size = 0x400, scoped, tag = 'output window, operand 0, single buffered']
    #allocation4 [shape = 's32[1]{0}', space=sflag, size = 0x4, scoped, tag = 'scoped memory for audio_urgency_forward.1']
    %13 = vsyncpa [#allocation4], 0
    // Predicated region
    $region2: #{audio_urgency_forward.1} parent=1 // pred_check
      _
    $region3: #{audio_urgency_forward.1} parent=1 // pred_check_branch
      %15 = sbr.rel (0) target = $region5
    $region4: #{audio_urgency_forward.1} parent=1 // pred_region
      _
    $region5: #{audio_urgency_forward.1} parent=1 // pred_fallthru
      _
    // Predicated region
    $region6: #{audio_urgency_forward.1} parent=1 // pred_check
      _
    $region7: #{audio_urgency_forward.1} parent=1 // pred_check_branch
      %17 = sbr.rel (0) target = $region9
    $region8: #{audio_urgency_forward.1} parent=1 // pred_region
      _
    $region9: #{audio_urgency_forward.1} parent=1 // pred_fallthru
      _
    // Predicated region
    $region10: #{audio_urgency_forward.1} parent=1 // pred_check
      _
    $region11: #{audio_urgency_forward.1} parent=1 // pred_check_branch
      %19 = sbr.rel (0) target = $region13
    $region12: #{audio_urgency_forward.1} parent=1 // pred_region
      _
    $region13: #{audio_urgency_forward.1} parent=1 // pred_fallthru
      _
    // Predicated region
    $region14: #{audio_urgency_forward.1} parent=1 // pred_check
      _
    $region15: #{audio_urgency_forward.1} parent=1 // pred_check_branch
      %21 = sbr.rel (0) target = $region17
    $region16: #{audio_urgency_forward.1} parent=1 // pred_region
      _
    $region17: #{audio_urgency_forward.1} parent=1 // pred_fallthru
      _
    // Predicated region
    $region18: #{audio_urgency_forward.1} parent=1 // pred_check
      _
    $region19: #{audio_urgency_forward.1} parent=1 // pred_check_branch
      %23 = sbr.rel (0) target = $region21
    $region20: #{audio_urgency_forward.1} parent=1 // pred_region
      _
    $region21: #{audio_urgency_forward.1} parent=1 // pred_fallthru
      _
    // Predicated region
    $region22: #{audio_urgency_forward.1} parent=1 // pred_check
      _
    $region23: #{audio_urgency_forward.1} parent=1 // pred_check_branch
      %25 = sbr.rel (0) target = $region25
    $region24: #{audio_urgency_forward.1} parent=1 // pred_region
      _
    $region25: #{audio_urgency_forward.1} parent=1 // pred_fallthru
      _
    // Predicated region
    $region26: #{audio_urgency_forward.1} parent=1 // pred_check
      _
    $region27: #{audio_urgency_forward.1} parent=1 // pred_check_branch
      %27 = sbr.rel (0) target = $region29
    $region28: #{audio_urgency_forward.1} parent=1 // pred_region
      _
    $region29: #{audio_urgency_forward.1} parent=1 // pred_fallthru
      _
    %v29 = vld [vmem:[%s0] sm:$0xff]
    %v30 = vpack.c.bf16 %v29, %v29
    %v31 = vld [vmem:[%s1] sm:$0xf]
    %v32 = vld [vmem:[%s1 + $0x4] sm:$0xf]
    %v33 = vld [vmem:[%s1 + $0x8] sm:$0xf]
    %v34 = vld [vmem:[%s1 + $0xc] sm:$0xf]
    %v35 = vld [vmem:[%s1 + $0x10] sm:$0xf]
    %v36 = vld [vmem:[%s1 + $0x14] sm:$0xf]
    %v37 = vld [vmem:[%s1 + $0x18] sm:$0xf]
    %v38 = vld [vmem:[%s1 + $0x1c] sm:$0xf]
    %v39 = vld [vmem:[%s1 + $0x20] sm:$0xf]
    %v40 = vld [vmem:[%s1 + $0x24] sm:$0xf]
    %v41 = vld [vmem:[%s1 + $0x28] sm:$0xf]
    %v42 = vld [vmem:[%s1 + $0x2c] sm:$0xf]
    %v43 = vld [vmem:[%s1 + $0x30] sm:$0xf]
    %v44 = vld [vmem:[%s1 + $0x34] sm:$0xf]
    %v45 = vld [vmem:[%s1 + $0x38] sm:$0xf]
    %v46 = vld [vmem:[%s1 + $0x3c] sm:$0xf]
    %v47 = vld [vmem:[%s2] sm:$0xff]
    %v48 = vld [vmem:[%s2 + $0x8] sm:$0xff]
    %v49 = vld [vmem:[%s2 + $0x10] sm:$0xff]
    %v50 = vld [vmem:[%s2 + $0x18] sm:$0xff]
    %v51 = vld [vmem:[%s2 + $0x20] sm:$0xff]
    %v52 = vld [vmem:[%s2 + $0x28] sm:$0xff]
    %v53 = vld [vmem:[%s2 + $0x30] sm:$0xff]
    %v54 = vld [vmem:[%s2 + $0x38] sm:$0xff]
    %v55 = vld [vmem:[%s2 + $0x40] sm:$0xff]
    %v56 = vld [vmem:[%s2 + $0x48] sm:$0xff]
    %v57 = vld [vmem:[%s2 + $0x50] sm:$0xff]
    %v58 = vld [vmem:[%s2 + $0x58] sm:$0xff]
    %v59 = vld [vmem:[%s2 + $0x60] sm:$0xff]
    %v60 = vld [vmem:[%s2 + $0x68] sm:$0xff]
    %v61 = vld [vmem:[%s2 + $0x70] sm:$0xff]
    %v62 = vld [vmem:[%s2 + $0x78] sm:$0xff]
    %64 = vset.pattern.permute.xlu0 0
    %65 = vperm.xlu0 %64, %v47
    %v66 = vpop.permute.xlu0 %65
    %69 = vset.pattern.permute.xlu0 0
    %70 = vperm.xlu0 %69, %v48
    %v71 = vpop.permute.xlu0 %70
    %74 = vset.pattern.permute.xlu0 0
    %75 = vperm.xlu0 %74, %v49
    %v76 = vpop.permute.xlu0 %75
    %79 = vset.pattern.permute.xlu0 0
    %80 = vperm.xlu0 %79, %v50
    %v81 = vpop.permute.xlu0 %80
    %84 = vset.pattern.permute.xlu0 0
    %85 = vperm.xlu0 %84, %v51
    %v86 = vpop.permute.xlu0 %85
    %89 = vset.pattern.permute.xlu0 0
    %90 = vperm.xlu0 %89, %v52
    %v91 = vpop.permute.xlu0 %90
    %94 = vset.pattern.permute.xlu0 0
    %95 = vperm.xlu0 %94, %v53
    %v96 = vpop.permute.xlu0 %95
    %99 = vset.pattern.permute.xlu0 0
    %100 = vperm.xlu0 %99, %v54
    %v101 = vpop.permute.xlu0 %100
    %104 = vset.pattern.permute.xlu0 0
    %105 = vperm.xlu0 %104, %v55
    %v106 = vpop.permute.xlu0 %105
    %109 = vset.pattern.permute.xlu0 0
    %110 = vperm.xlu0 %109, %v56
    %v111 = vpop.permute.xlu0 %110
    %114 = vset.pattern.permute.xlu0 0
    %115 = vperm.xlu0 %114, %v57
    %v116 = vpop.permute.xlu0 %115
    %119 = vset.pattern.permute.xlu0 0
    %120 = vperm.xlu0 %119, %v58
    %v121 = vpop.permute.xlu0 %120
    %124 = vset.pattern.permute.xlu0 0
    %125 = vperm.xlu0 %124, %v59
    %v126 = vpop.permute.xlu0 %125
    %129 = vset.pattern.permute.xlu0 0
    %130 = vperm.xlu0 %129, %v60
    %v131 = vpop.permute.xlu0 %130
    %134 = vset.pattern.permute.xlu0 0
    %135 = vperm.xlu0 %134, %v61
    %v136 = vpop.permute.xlu0 %135
    %139 = vset.pattern.permute.xlu0 0
    %140 = vperm.xlu0 %139, %v62
    %v141 = vpop.permute.xlu0 %140
    %v159 = vunpack.c.l.b16 %v31
    %v160 = vunpack.c.l.b16 %v32
    %v161 = vunpack.c.l.b16 %v33
    %v162 = vunpack.c.l.b16 %v34
    %v163 = vunpack.c.l.b16 %v35
    %v164 = vunpack.c.l.b16 %v36
    %v165 = vunpack.c.l.b16 %v37
    %v166 = vunpack.c.l.b16 %v38
    %v167 = vunpack.c.l.b16 %v39
    %v168 = vunpack.c.l.b16 %v40
    %v169 = vunpack.c.l.b16 %v41
    %v170 = vunpack.c.l.b16 %v42
    %v171 = vunpack.c.l.b16 %v43
    %v172 = vunpack.c.l.b16 %v44
    %v173 = vunpack.c.l.b16 %v45
    %v174 = vunpack.c.l.b16 %v46
    %v175 = vpack.c.b16 %v160, %v159
    %v176 = vpack.c.b16 %v162, %v161
    %v177 = vpack.c.b16 %v164, %v163
    %v178 = vpack.c.b16 %v166, %v165
    %v179 = vpack.c.b16 %v168, %v167
    %v180 = vpack.c.b16 %v170, %v169
    %v181 = vpack.c.b16 %v172, %v171
    %v182 = vpack.c.b16 %v174, %v173
    %vm183 = vcmask 162816
    %v185 = vsel %vm183, %v175, 0
    %v188 = vsel %vm183, %v176, 0
    %v191 = vsel %vm183, %v177, 0
    %v194 = vsel %vm183, %v178, 0
    %v197 = vsel %vm183, %v179, 0
    %v200 = vsel %vm183, %v180, 0
    %v203 = vsel %vm183, %v181, 0
    %v206 = vsel %vm183, %v182, 0
    %v209 = vsel %vm183, %v30, 0
    %211 = vmatprep.subr.bf16.mxu0 0
    %212 = vmatpush1.bf16.xpose.msra.mxu0 0
    %213 = vmatprep.subr.bf16.mxu0 0
    %214 = vmatpush1.bf16.xpose.msra.mxu0 0
    %215 = vmatprep.subr.bf16.mxu0 0
    %216 = vmatpush1.bf16.xpose.msra.mxu0 0
    %217 = vmatprep.subr.bf16.mxu0 0
    %218 = vmatpush1.bf16.xpose.msra.mxu0 0
    %219 = vmatprep.subr.bf16.mxu0 0
    %220 = vmatpush1.bf16.xpose.msra.mxu0 0
    %221 = vmatprep.subr.bf16.mxu0 0
    %222 = vmatpush1.bf16.xpose.msra.mxu0 0
    %223 = vmatprep.subr.bf16.mxu0 0
    %224 = vmatpush1.bf16.xpose.msra.mxu0 0
    %225 = vmatprep.subr.bf16.mxu0 0
    %226 = vmatpush1.bf16.xpose.msra.mxu0 %v209
    %227 = vmatprep.subr.bf16.mxu0 0
    %228 = vmatpush2.bf16.xpose.msra.mxu0 0
    %229 = vmatprep.subr.bf16.mxu0 0
    %230 = vmatpush2.bf16.xpose.msra.mxu0 0
    %231 = vmatprep.subr.bf16.mxu0 0
    %232 = vmatpush2.bf16.xpose.msra.mxu0 0
    %233 = vmatprep.subr.bf16.mxu0 0
    %234 = vmatpush2.bf16.xpose.msra.mxu0 0
    %235 = vmatprep.subr.bf16.mxu0 0
    %236 = vmatpush2.bf16.xpose.msra.mxu0 0
    %237 = vmatprep.subr.bf16.mxu0 0
    %238 = vmatpush2.bf16.xpose.msra.mxu0 0
    %239 = vmatprep.subr.bf16.mxu0 0
    %240 = vmatpush2.bf16.xpose.msra.mxu0 0
    %241 = vmatprep.subr.bf16.mxu0 0
    %242 = vmatpush2.bf16.xpose.msra.mxu0 0
    %243 = vmatprep.mubr.bf16.mxu0 0
    %244 = vmatmul.mubr.bf16.gmra.mxu0 %v185
    %v245 = vpop.f32.mrf.mxu0
    %v246 = vadd.f32 %v66, %v245
    %v247 = vpop.f32.mrf.mxu0
    %v248 = vpop.f32.mrf.mxu0
    %v249 = vadd.f32 %v71, %v248
    %v250 = vpop.f32.mrf.mxu0
    %251 = vmatprep.mubr.bf16.mxu0 0
    %252 = vmatmul.mubr.bf16.gmra.mxu0 %v188
    %v253 = vpop.f32.mrf.mxu0
    %v254 = vadd.f32 %v76, %v253
    %v255 = vpop.f32.mrf.mxu0
    %v256 = vpop.f32.mrf.mxu0
    %v257 = vadd.f32 %v81, %v256
    %v258 = vpop.f32.mrf.mxu0
    %259 = vmatprep.mubr.bf16.mxu0 0
    %260 = vmatmul.mubr.bf16.gmra.mxu0 %v191
    %v261 = vpop.f32.mrf.mxu0
    %v262 = vadd.f32 %v86, %v261
    %v263 = vpop.f32.mrf.mxu0
    %v264 = vpop.f32.mrf.mxu0
    %v265 = vadd.f32 %v91, %v264
    %v266 = vpop.f32.mrf.mxu0
    %267 = vmatprep.mubr.bf16.mxu0 0
    %268 = vmatmul.mubr.bf16.gmra.mxu0 %v194
    %v269 = vpop.f32.mrf.mxu0
    %v270 = vadd.f32 %v96, %v269
    %v271 = vpop.f32.mrf.mxu0
    %v272 = vpop.f32.mrf.mxu0
    %v273 = vadd.f32 %v101, %v272
    %v274 = vpop.f32.mrf.mxu0
    %275 = vmatprep.mubr.bf16.mxu0 0
    %276 = vmatmul.mubr.bf16.gmra.mxu0 %v197
    %v277 = vpop.f32.mrf.mxu0
    %v278 = vadd.f32 %v106, %v277
    %v279 = vpop.f32.mrf.mxu0
    %v280 = vpop.f32.mrf.mxu0
    %v281 = vadd.f32 %v111, %v280
    %v282 = vpop.f32.mrf.mxu0
    %283 = vmatprep.mubr.bf16.mxu0 0
    %284 = vmatmul.mubr.bf16.gmra.mxu0 %v200
    %v285 = vpop.f32.mrf.mxu0
    %v286 = vadd.f32 %v116, %v285
    %v287 = vpop.f32.mrf.mxu0
    %v288 = vpop.f32.mrf.mxu0
    %v289 = vadd.f32 %v121, %v288
    %v290 = vpop.f32.mrf.mxu0
    %291 = vmatprep.mubr.bf16.mxu0 0
    %292 = vmatmul.mubr.bf16.gmra.mxu0 %v203
    %v293 = vpop.f32.mrf.mxu0
    %v294 = vadd.f32 %v126, %v293
    %v295 = vpop.f32.mrf.mxu0
    %v296 = vpop.f32.mrf.mxu0
    %v297 = vadd.f32 %v131, %v296
    %v298 = vpop.f32.mrf.mxu0
    %299 = vmatprep.mubr.bf16.mxu0 0
    %300 = vmatmul.mubr.bf16.gmra.mxu0 %v206
    %v301 = vpop.f32.mrf.mxu0
    %v302 = vadd.f32 %v136, %v301
    %v303 = vpop.f32.mrf.mxu0
    %v304 = vpop.f32.mrf.mxu0
    %v305 = vadd.f32 %v141, %v304
    %v306 = vpop.f32.mrf.mxu0
    %307 = vdwg.mxu0
    %v308 = vmax.f32 %v246, 0.0
    %v309 = vmax.f32 %v249, 0.0
    %v310 = vmax.f32 %v254, 0.0
    %v311 = vmax.f32 %v257, 0.0
    %v312 = vmax.f32 %v262, 0.0
    %v313 = vmax.f32 %v265, 0.0
    %v314 = vmax.f32 %v270, 0.0
    %v315 = vmax.f32 %v273, 0.0
    %v316 = vmax.f32 %v278, 0.0
    %v317 = vmax.f32 %v281, 0.0
    %v318 = vmax.f32 %v286, 0.0
    %v319 = vmax.f32 %v289, 0.0
    %v320 = vmax.f32 %v294, 0.0
    %v321 = vmax.f32 %v297, 0.0
    %v322 = vmax.f32 %v302, 0.0
    %v323 = vmax.f32 %v305, 0.0
    %v324 = vpack.c.bf16 %v309, %v308
    %v325 = vpack.c.bf16 %v311, %v310
    %v326 = vpack.c.bf16 %v313, %v312
    %v327 = vpack.c.bf16 %v315, %v314
    %v328 = vpack.c.bf16 %v317, %v316
    %v329 = vpack.c.bf16 %v319, %v318
    %v330 = vpack.c.bf16 %v321, %v320
    %v331 = vpack.c.bf16 %v323, %v322
    %v332 = vld [vmem:[%s3] sm:$0xf]
    %v333 = vld [vmem:[%s3 + $0x4] sm:$0xf]
    %v334 = vld [vmem:[%s3 + $0x8] sm:$0xf]
    %v335 = vld [vmem:[%s3 + $0xc] sm:$0xf]
    %v336 = vld [vmem:[%s3 + $0x10] sm:$0xf]
    %v337 = vld [vmem:[%s3 + $0x14] sm:$0xf]
    %v338 = vld [vmem:[%s3 + $0x18] sm:$0xf]
    %v339 = vld [vmem:[%s3 + $0x1c] sm:$0xf]
    %v340 = vld [vmem:[%s4] sm:$0xff]
    %v341 = vld [vmem:[%s4 + $0x8] sm:$0xff]
    %v342 = vld [vmem:[%s4 + $0x10] sm:$0xff]
    %v343 = vld [vmem:[%s4 + $0x18] sm:$0xff]
    %v344 = vld [vmem:[%s4 + $0x20] sm:$0xff]
    %v345 = vld [vmem:[%s4 + $0x28] sm:$0xff]
    %v346 = vld [vmem:[%s4 + $0x30] sm:$0xff]
    %v347 = vld [vmem:[%s4 + $0x38] sm:$0xff]
    %349 = vset.pattern.permute.xlu0 0
    %350 = vperm.xlu0 %349, %v340
    %v351 = vpop.permute.xlu0 %350
    %354 = vset.pattern.permute.xlu0 0
    %355 = vperm.xlu0 %354, %v341
    %v356 = vpop.permute.xlu0 %355
    %359 = vset.pattern.permute.xlu0 0
    %360 = vperm.xlu0 %359, %v342
    %v361 = vpop.permute.xlu0 %360
    %364 = vset.pattern.permute.xlu0 0
    %365 = vperm.xlu0 %364, %v343
    %v366 = vpop.permute.xlu0 %365
    %369 = vset.pattern.permute.xlu0 0
    %370 = vperm.xlu0 %369, %v344
    %v371 = vpop.permute.xlu0 %370
    %374 = vset.pattern.permute.xlu0 0
    %375 = vperm.xlu0 %374, %v345
    %v376 = vpop.permute.xlu0 %375
    %379 = vset.pattern.permute.xlu0 0
    %380 = vperm.xlu0 %379, %v346
    %v381 = vpop.permute.xlu0 %380
    %384 = vset.pattern.permute.xlu0 0
    %385 = vperm.xlu0 %384, %v347
    %v386 = vpop.permute.xlu0 %385
    %v396 = vunpack.c.l.b16 %v332
    %v397 = vunpack.c.l.b16 %v333
    %v398 = vunpack.c.l.b16 %v334
    %v399 = vunpack.c.l.b16 %v335
    %v400 = vunpack.c.l.b16 %v336
    %v401 = vunpack.c.l.b16 %v337
    %v402 = vunpack.c.l.b16 %v338
    %v403 = vunpack.c.l.b16 %v339
    %v404 = vpack.c.b16 %v397, %v396
    %v405 = vpack.c.b16 %v399, %v398
    %v406 = vpack.c.b16 %v401, %v400
    %v407 = vpack.c.b16 %v403, %v402
    %412 = vmatprep.subr.bf16.mxu0 0
    %413 = vmatpush1.bf16.msra.mxu0 %v331
    %414 = vmatprep.subr.bf16.mxu0 0
    %415 = vmatpush1.bf16.msra.mxu0 %v330
    %416 = vmatprep.subr.bf16.mxu0 0
    %417 = vmatpush1.bf16.msra.mxu0 %v329
    %418 = vmatprep.subr.bf16.mxu0 0
    %419 = vmatpush1.bf16.msra.mxu0 %v328
    %420 = vmatprep.subr.bf16.mxu0 0
    %421 = vmatpush1.bf16.msra.mxu0 %v327
    %422 = vmatprep.subr.bf16.mxu0 0
    %423 = vmatpush1.bf16.msra.mxu0 %v326
    %424 = vmatprep.subr.bf16.mxu0 0
    %425 = vmatpush1.bf16.msra.mxu0 %v325
    %426 = vmatprep.subr.bf16.mxu0 0
    %427 = vmatpush1.bf16.msra.mxu0 %v324
    %428 = vmatprep.subr.bf16.mxu0 0
    %429 = vmatpush2.bf16.msra.mxu0 0
    %430 = vmatprep.subr.bf16.mxu0 0
    %431 = vmatpush2.bf16.msra.mxu0 0
    %432 = vmatprep.subr.bf16.mxu0 0
    %433 = vmatpush2.bf16.msra.mxu0 0
    %434 = vmatprep.subr.bf16.mxu0 0
    %435 = vmatpush2.bf16.msra.mxu0 0
    %436 = vmatprep.subr.bf16.mxu0 0
    %437 = vmatpush2.bf16.msra.mxu0 0
    %438 = vmatprep.subr.bf16.mxu0 0
    %439 = vmatpush2.bf16.msra.mxu0 0
    %440 = vmatprep.subr.bf16.mxu0 0
    %441 = vmatpush2.bf16.msra.mxu0 0
    %442 = vmatprep.subr.bf16.mxu0 0
    %443 = vmatpush2.bf16.msra.mxu0 0
    %444 = vmatprep.mubr.bf16.mxu0 0
    %445 = vmatmul.mubr.bf16.gmra.mxu0 %v404
    %v446 = vpop.f32.mrf.mxu0
    %v447 = vadd.f32 %v351, %v446
    %v448 = vpop.f32.mrf.mxu0
    %v449 = vpop.f32.mrf.mxu0
    %v450 = vadd.f32 %v356, %v449
    %v451 = vpop.f32.mrf.mxu0
    %452 = vmatprep.mubr.bf16.mxu0 0
    %453 = vmatmul.mubr.bf16.gmra.mxu0 %v405
    %v454 = vpop.f32.mrf.mxu0
    %v455 = vadd.f32 %v361, %v454
    %v456 = vpop.f32.mrf.mxu0
    %v457 = vpop.f32.mrf.mxu0
    %v458 = vadd.f32 %v366, %v457
    %v459 = vpop.f32.mrf.mxu0
    %460 = vmatprep.mubr.bf16.mxu0 0
    %461 = vmatmul.mubr.bf16.gmra.mxu0 %v406
    %v462 = vpop.f32.mrf.mxu0
    %v463 = vadd.f32 %v371, %v462
    %v464 = vpop.f32.mrf.mxu0
    %v465 = vpop.f32.mrf.mxu0
    %v466 = vadd.f32 %v376, %v465
    %v467 = vpop.f32.mrf.mxu0
    %468 = vmatprep.mubr.bf16.mxu0 0
    %469 = vmatmul.mubr.bf16.gmra.mxu0 %v407
    %v470 = vpop.f32.mrf.mxu0
    %v471 = vadd.f32 %v381, %v470
    %v472 = vpop.f32.mrf.mxu0
    %v473 = vpop.f32.mrf.mxu0
    %v474 = vadd.f32 %v386, %v473
    %v475 = vpop.f32.mrf.mxu0
    %476 = vdwg.mxu0
    %v477 = vmax.f32 %v447, 0.0
    %v478 = vmax.f32 %v450, 0.0
    %v479 = vmax.f32 %v455, 0.0
    %v480 = vmax.f32 %v458, 0.0
    %v481 = vmax.f32 %v463, 0.0
    %v482 = vmax.f32 %v466, 0.0
    %v483 = vmax.f32 %v471, 0.0
    %v484 = vmax.f32 %v474, 0.0
    %v485 = vld [vmem:[%s5] sm:$0xff]
    %v486 = vld [vmem:[%s5 + $0x8] sm:$0xff]
    %v487 = vld [vmem:[%s5 + $0x10] sm:$0xff]
    %v488 = vld [vmem:[%s5 + $0x18] sm:$0xff]
    %v489 = vld [vmem:[%s5 + $0x20] sm:$0xff]
    %v490 = vld [vmem:[%s5 + $0x28] sm:$0xff]
    %v491 = vld [vmem:[%s5 + $0x30] sm:$0xff]
    %v492 = vld [vmem:[%s5 + $0x38] sm:$0xff]
    %494 = vset.pattern.permute.xlu0 0
    %495 = vperm.xlu0 %494, %v485
    %v496 = vpop.permute.xlu0 %495
    %499 = vset.pattern.permute.xlu0 0
    %500 = vperm.xlu0 %499, %v486
    %v501 = vpop.permute.xlu0 %500
    %504 = vset.pattern.permute.xlu0 0
    %505 = vperm.xlu0 %504, %v487
    %v506 = vpop.permute.xlu0 %505
    %509 = vset.pattern.permute.xlu0 0
    %510 = vperm.xlu0 %509, %v488
    %v511 = vpop.permute.xlu0 %510
    %514 = vset.pattern.permute.xlu0 0
    %515 = vperm.xlu0 %514, %v489
    %v516 = vpop.permute.xlu0 %515
    %519 = vset.pattern.permute.xlu0 0
    %520 = vperm.xlu0 %519, %v490
    %v521 = vpop.permute.xlu0 %520
    %524 = vset.pattern.permute.xlu0 0
    %525 = vperm.xlu0 %524, %v491
    %v526 = vpop.permute.xlu0 %525
    %529 = vset.pattern.permute.xlu0 0
    %530 = vperm.xlu0 %529, %v492
    %v531 = vpop.permute.xlu0 %530
    %v533 = vmul.f32 %v477, %v496
    %v534 = vmul.f32 %v478, %v501
    %v535 = vmul.f32 %v479, %v506
    %v536 = vmul.f32 %v480, %v511
    %v537 = vmul.f32 %v481, %v516
    %v538 = vmul.f32 %v482, %v521
    %v539 = vmul.f32 %v483, %v526
    %v540 = vmul.f32 %v484, %v531
    %vm541 = vcmask 64512
    %v542 = vsel %vm541, %v533, 0.0
    %v543 = vsel %vm541, %v534, 0.0
    %v544 = vadd.f32 %v542, %v543
    %v545 = vsel %vm541, %v535, 0.0
    %v546 = vadd.f32 %v544, %v545
    %v547 = vsel %vm541, %v536, 0.0
    %v548 = vadd.f32 %v546, %v547
    %v549 = vsel %vm541, %v537, 0.0
    %v550 = vadd.f32 %v548, %v549
    %v551 = vsel %vm541, %v538, 0.0
    %v552 = vadd.f32 %v550, %v551
    %v553 = vsel %vm541, %v539, 0.0
    %v554 = vadd.f32 %v552, %v553
    %v555 = vsel %vm541, %v540, 0.0
    %v556 = vadd.f32 %v554, %v555
    %v557 = vrot.slane %v556, 4
    %v558 = vadd.f32 %v556, %v557
    %v559 = vrot.slane %v558, 2
    %v560 = vadd.f32 %v558, %v559
    %v561 = vrot.slane %v560, 1
    %v562 = vadd.f32 %v560, %v561
    %s563 = sld [smem:[#allocation2]]
    %v564 = vstv %s563
    %v565 = vadd.f32 %v562, %v564
    %v566 = vxor.u32 %v565, 2147483648
    %v567 = vmul.f32 %v566, 1.442695
    %v568 = vpow.pop %v567
    %v569 = vadd.f32 %v568, 1.0
    %v570 = vrcp.pop %v569
    %v571 = vmul.f32 1.0, %v570
    %vm572 = vcmask 57344
    %573 = vst.msk [vmem:[#allocation3] sm:$0x1] %vm572, %v571
    // Predicated region
    $region30: #{audio_urgency_forward.1} parent=1 // pred_check
      _
    $region31: #{audio_urgency_forward.1} parent=1 // pred_check_branch
      %575 = sbr.rel (0) target = $region33
    $region32: #{audio_urgency_forward.1} parent=1 // pred_region
      %s577 = ssub.s32 16, 16
      %578 = vsyncadd [#allocation4], %s577
      %s580 = sshll.u32 [#allocation3], 4
      %s581 = int_to_ptr.vmem [resolvable:$true] %s580
      %583 = dma.vmem_to_hbm [thread:$0]  %s581, 16, %s7, [#allocation4]
    $region33: #{audio_urgency_forward.1} parent=1 // pred_fallthru
      _
    // Predicated region
    $region34: #{audio_urgency_forward.1} parent=1 // pred_check
      _
    $region35: #{audio_urgency_forward.1} parent=1 // pred_check_branch
      %585 = sbr.rel (0) target = $region37
    $region36: #{audio_urgency_forward.1} parent=1 // pred_region
      %586 = dma.done [#allocation4], 16
    $region37: #{audio_urgency_forward.1} parent=1 // pred_fallthru
      _
    %587 = vsyncpa [#allocation4], 1

</llo_original>
